<compile_context>
chip_gen: v5e
topology: v5e:2x2
jax: 0.10.0
libtpu: 0.0.40
codegen_flags: <defaults>
</compile_context>

<pallas_src>
import jax
import jax.numpy as jnp
from jax.experimental import pallas as pl
from jax.experimental.pallas import tpu as pltpu


# ----------------------- bilinear weights (host-side, hoisted) ----------------


def _bilinear_matrix(out_size: int, in_size: int) -> jnp.ndarray:
    """Matrix M (out,in) s.t. M @ x == torch bilinear resize (align_corners=False)."""
    i = jnp.arange(out_size, dtype=jnp.float32)
    src = (i + 0.5) * (in_size / out_size) - 0.5
    src = jnp.clip(src, 0.0, float(in_size - 1))
    lo = jnp.floor(src).astype(jnp.int32)
    hi = jnp.minimum(lo + 1, in_size - 1)
    w_hi = src - lo.astype(jnp.float32)
    w_lo = 1.0 - w_hi
    rows = jnp.arange(out_size)
    M = jnp.zeros((out_size, in_size), jnp.float32)
    M = M.at[rows, lo].add(w_lo)
    M = M.at[rows, hi].add(w_hi)
    return M


# --------------------------- fused video-reward kernel ------------------------


def _make_fused_kernel(T, tile_t, inv_t):
    def kernel(x_ref, v_ref, b_ref, o_ref):
        t = pl.program_id(1)

        @pl.when(t == 0)
        def _init():
            o_ref[...] = jnp.zeros_like(o_ref)

        # Raw-width HBM read; cast to f32 only inside the kernel.
        x = x_ref[0].astype(jnp.float32)                    # (tile_t, Din)
        v = v_ref[...]                                      # (1, Din) f32
        # Per-frame score: VPU multiply + cross-lane reduce (XLU). Rows are
        # independent, so garbage in padded OOB rows never leaks across rows.
        row = jnp.sum(x * v, axis=-1, keepdims=True)        # (tile_t, 1)
        # Mask rows past T (the last T block may be partial / read unspecified data).
        rid = jax.lax.broadcasted_iota(jnp.int32, (tile_t, 1), 0) + t * tile_t
        row = jnp.where(rid < T, row, 0.0)
        # Accumulate straight into the resident output block (scalar splat).
        o_ref[...] += jnp.sum(row)

        @pl.when(t == pl.num_programs(1) - 1)
        def _finalize():
            o_ref[...] = jax.nn.sigmoid(o_ref[...] * inv_t + b_ref[0])

    return kernel


def _pick_t_tile(T, bytes_per_row, cap_bytes=4 << 20, max_rows=512):
    # Big tiles push the mem-bound pass toward the HBM roofline and amortize
    # the ~0.35us/step pipeline overhead; cap per-buffer size so double
    # buffering stays well inside VMEM on all of v5e/v6e/v7x.
    cap_rows = max(8, min(max_rows, cap_bytes // max(1, bytes_per_row)))
    if T <= cap_rows:
        return T                        # full-extent block along T (always legal)
    return (cap_rows // 8) * 8          # multiple of 8; partial last block is masked


def fused_video_reward(frames, v, bias, *, tile_t=None):
    """frames: (B, T, Din) raw dtype; v: (1, Din) f32; bias: (1,) f32.

    Returns (B, 8, 128) f32 where [:, 0, 0] = sigmoid(mean_T(frame . v) + bias).
    (The output tile is a full (8,128) vreg for lane-dense, unmasked stores.)
    """
    B, T, Din = frames.shape
    itemsize = jnp.dtype(frames.dtype).itemsize
    if tile_t is None:
        tile_t = _pick_t_tile(T, Din * itemsize)
    assert tile_t == T or tile_t % 8 == 0, "tile_t must be a multiple of 8 or == T"

    grid = (B, pl.cdiv(T, tile_t))
    kernel = _make_fused_kernel(T=T, tile_t=tile_t, inv_t=1.0 / T)

    # Double-buffered frame tile + v + output tile, with headroom; keep the
    # scoped limit explicit so bigger tiles don't hit the 16/32 MiB defaults.
    vmem_need = 2 * tile_t * Din * itemsize + 2 * Din * 4 + 2 * 8 * 128 * 4 + (1 << 20)
    vmem_limit = int(min(96 << 20, max(32 << 20, 2 * vmem_need)))

    return pl.pallas_call(
        kernel,
        out_shape=jax.ShapeDtypeStruct((B, 8, 128), jnp.float32),
        grid_spec=pltpu.PrefetchScalarGridSpec(
            num_scalar_prefetch=0,
            grid=grid,
            in_specs=[
                pl.BlockSpec((1, tile_t, Din), lambda b, t: (b, t, 0)),
                pl.BlockSpec((1, Din), lambda b, t: (0, 0)),
                pl.BlockSpec(memory_space=pltpu.MemorySpace.SMEM),   # scalar bias
            ],
            out_specs=pl.BlockSpec((1, 8, 128), lambda b, t: (b, 0, 0)),
        ),
        compiler_params=pltpu.CompilerParams(
            dimension_semantics=("parallel", "arbitrary"),   # B across cores, T reduction
            vmem_limit_bytes=vmem_limit),
    )(frames, v, bias)


# ------------------------------------ module ----------------------------------


class VideRewardPallas:
    """Pallas re-implementation of VideReward.forward.

    forward(vid): vid (B, T, C, H, W) with pixel range [0, 1] -> reward (B,).
    """

    def __init__(self, in_channels, target_frame_size, key):
        self.in_channels = in_channels
        self.target_frame_size = tuple(target_frame_size)
        Ho, Wo = self.target_frame_size
        D = in_channels * Ho * Wo
        k1, _ = jax.random.split(key)
        # TODO(synk): TrajectoryDiscriminator / cotracker_forward is an external
        # CoTracker-based pretrained model whose architecture is not defined in
        # this module; it is replaced by a deterministic frozen linear scoring
        # head (mean over frames -> linear -> sigmoid).
        self.head_w = jax.random.normal(k1, (1, D), jnp.float32) / jnp.sqrt(D)
        self.head_b = jnp.zeros((1,), jnp.float32)
        self._v_cache = {}   # (C, H, W, dtype) -> (wh, ww, v); built once, reused

    def _fused_vector(self, C, H, W, dtype):
        key = (C, H, W, str(jnp.dtype(dtype)))
        if key not in self._v_cache:
            Ho, Wo = self.target_frame_size
            wh = _bilinear_matrix(Ho, H)                      # (Ho, H)
            ww = _bilinear_matrix(Wo, W)                      # (Wo, W)
            hw = self.head_w.reshape(C, Ho, Wo)
            # v[c,h,w] = sum_{ho,wo} head_w[c,ho,wo] * wh[ho,h] * ww[wo,w]
            # (never materializes the (C*H*W, C*Ho*Wo) resize GEMM weight).
            v = jnp.einsum('oh,cop,pw->chw', wh, hw, ww).reshape(1, C * H * W)
            if jnp.dtype(dtype) == jnp.uint8:
                v = v * (1.0 / 255.0)   # fold [0,255]->[0,1] normalization into v
            self._v_cache[key] = (wh, ww, v)
        return self._v_cache[key]

    def __call__(self, vid, *, tile_t=None):
        B, T, C, H, W = vid.shape
        _, _, v = self._fused_vector(C, H, W, vid.dtype)
        # 'b t c h w -> b t (c h w)': contiguous reshape only; the f32 cast
        # happens inside the kernel so the video is read at its native width.
        frames = vid.reshape(B, T, C * H * W)
        out = fused_video_reward(frames, v, self.head_b, tile_t=tile_t)  # (B, 8, 128)
        return out[:, 0, 0]                                              # (B,)


if __name__ == "__main__":
    key = jax.random.PRNGKey(0)
    k_vid, k_param = jax.random.split(key)

    B, T, C, H, W = 2, 12, 3, 16, 16
    target_frame_size = (8, 8)

    vid = jax.random.uniform(k_vid, (B, T, C, H, W), dtype=jnp.float32)  # pixels in [0, 1]

    model = VideRewardPallas(in_channels=C, target_frame_size=target_frame_size, key=k_param)
    # tile_t=8 forces a 2-block T reduction with a masked partial last block,
    # exercising the init / accumulate / mask / finalize paths of the kernel.
    r = jax.block_until_ready(model(vid, tile_t=8))

    assert r.shape == (B,), r.shape
    assert bool(jnp.all((r >= 0.0) & (r <= 1.0)))

    # Pure-JAX reference of the same math (separable bilinear resize -> mean over
    # T -> linear -> sigmoid) to validate the fused-GEMV kernel end to end.
    wh, ww, _ = model._fused_vector(C, H, W, vid.dtype)
    x32 = vid.astype(jnp.float32)
    resized = jnp.einsum('oh,btchw,pw->btcop', wh, x32, ww)        # (B,T,C,Ho,Wo)
    feats_ref = resized.reshape(B, T, -1)
    logits_ref = feats_ref.mean(axis=1) @ model.head_w[0] + model.head_b[0]
    r_ref = jax.nn.sigmoid(logits_ref)
    assert bool(jnp.allclose(r, r_ref, atol=1e-4, rtol=1e-4)), (r, r_ref)

    # Also check the single-block (default tile) path.
    r2 = jax.block_until_ready(model(vid))
    assert bool(jnp.allclose(r2, r_ref, atol=1e-4, rtol=1e-4)), (r2, r_ref)

    print("KERNEL_OK")
</pallas_src>

<mosaic_0001>
module attributes {stable_mosaic.version = 11 : i64} {
  func.func @kernel(%arg0: i32, %arg1: i32, %arg2: memref<1x8x768xf32, #tpu.memory_space<vmem>>, %arg3: memref<1x768xf32, #tpu.memory_space<vmem>>, %arg4: memref<1xf32, #tpu.memory_space<smem>>, %arg5: memref<1x8x128xf32, #tpu.memory_space<vmem>>) attributes {dimension_semantics = [#tpu.dimension_semantics<parallel>, #tpu.dimension_semantics<arbitrary>], iteration_bounds = array<i64: 2, 2>, scalar_prefetch = 0 : i64, scratch_operands = 0 : i64, tpu.core_type = #tpu.core_type<tc>, window_params = [{transform_indices = @transform_0, window_bounds = array<i64: 1, 8, 768>}, {pipeline_mode = #tpu.pipeline_mode<synchronous>, transform_indices = @transform_1, window_bounds = array<i64: 1, 768>}, {transform_indices = @transform_2, window_bounds = array<i64: 1>}, {transform_indices = @transform_3, window_bounds = array<i64: 1, 8, 128>}]} {
    %c0_i32 = arith.constant 0 : i32
    %0 = arith.cmpi eq, %arg1, %c0_i32 : i32
    %1 = arith.extui %0 : i1 to i32
    %c0_i32_0 = arith.constant 0 : i32
    %2 = arith.cmpi ne, %1, %c0_i32_0 : i32
    scf.if %2 {
      %cst_14 = arith.constant 0.000000e+00 : f32
      %29 = vector.broadcast %cst_14 : f32 to vector<1x8x128xf32>
      %c0_15 = arith.constant 0 : index
      %c0_16 = arith.constant 0 : index
      %c0_17 = arith.constant 0 : index
      %30 = vector.load %arg5[%c0_15, %c0_16, %c0_17] : memref<1x8x128xf32, #tpu.memory_space<vmem>>, vector<1x8x128xf32>
      tpu.vector_store %arg5[%c0_15, %c0_16, %c0_17], %29 {strides = array<i32>} : memref<1x8x128xf32, #tpu.memory_space<vmem>>, vector<1x8x128xf32>,
    } else {
    }
    %c0 = arith.constant 0 : index
    %c0_1 = arith.constant 0 : index
    %c0_2 = arith.constant 0 : index
    %3 = vector.load %arg2[%c0, %c0_1, %c0_2] : memref<1x8x768xf32, #tpu.memory_space<vmem>>, vector<1x8x768xf32>
    %4 = vector.shape_cast %3 : vector<1x8x768xf32> to vector<8x768xf32>
    %c0_3 = arith.constant 0 : index
    %c0_4 = arith.constant 0 : index
    %5 = vector.load %arg3[%c0_3, %c0_4] : memref<1x768xf32, #tpu.memory_space<vmem>>, vector<1x768xf32>
    %6 = vector.broadcast %5 : vector<1x768xf32> to vector<8x768xf32>
    %7 = arith.mulf %4, %6 : vector<8x768xf32>
    %cst = arith.constant dense<0.000000e+00> : vector<8xf32>
    %8 = vector.multi_reduction <add>, %7, %cst [1] : vector<8x768xf32> to vector<8xf32>
    %9 = vector.shape_cast %8 : vector<8xf32> to vector<8x1xf32>
    %10 = tpu.iota {dimensions = array<i32: 0>} : vector<8x1xi32>
    %c8_i32 = arith.constant 8 : i32
    %11 = arith.muli %arg1, %c8_i32 : i32
    %12 = vector.broadcast %11 : i32 to vector<8x1xi32>
    %13 = arith.addi %10, %12 : vector<8x1xi32>
    %c12_i32 = arith.constant 12 : i32
    %14 = vector.broadcast %c12_i32 : i32 to vector<8x1xi32>
    %15 = arith.cmpi slt, %13, %14 : vector<8x1xi32>
    %cst_5 = arith.constant 0.000000e+00 : f32
    %16 = vector.broadcast %cst_5 : f32 to vector<8x1xf32>
    %17 = arith.select %15, %9, %16 : vector<8x1xi1>, vector<8x1xf32>
    %c0_6 = arith.constant 0 : index
    %c0_7 = arith.constant 0 : index
    %c0_8 = arith.constant 0 : index
    %18 = vector.load %arg5[%c0_6, %c0_7, %c0_8] : memref<1x8x128xf32, #tpu.memory_space<vmem>>, vector<1x8x128xf32>
    %19 = vector.shape_cast %17 : vector<8x1xf32> to vector<1x8x1xf32>
    %cst_9 = arith.constant dense<0.000000e+00> : vector<1xf32>
    %20 = vector.multi_reduction <add>, %19, %cst_9 [1, 2] : vector<1x8x1xf32> to vector<1xf32>
    %21 = vector.shape_cast %20 : vector<1xf32> to vector<1x1x1xf32>
    %22 = vector.extract %21[0, 0, 0] : f32 from vector<1x1x1xf32>
    %23 = vector.broadcast %22 : f32 to vector<1x8x128xf32>
    %24 = arith.addf %18, %23 : vector<1x8x128xf32>
    %c0_10 = arith.constant 0 : index
    %c0_11 = arith.constant 0 : index
    %c0_12 = arith.constant 0 : index
    %25 = vector.load %arg5[%c0_10, %c0_11, %c0_12] : memref<1x8x128xf32, #tpu.memory_space<vmem>>, vector<1x8x128xf32>
    tpu.vector_store %arg5[%c0_10, %c0_11, %c0_12], %24 {strides = array<i32>} : memref<1x8x128xf32, #tpu.memory_space<vmem>>, vector<1x8x128xf32>,
    %c1_i32 = arith.constant 1 : i32
    %26 = arith.cmpi eq, %arg1, %c1_i32 : i32
    %27 = arith.extui %26 : i1 to i32
    %c0_i32_13 = arith.constant 0 : i32
    %28 = arith.cmpi ne, %27, %c0_i32_13 : i32
    scf.if %28 {
      %c0_14 = arith.constant 0 : index
      %c0_15 = arith.constant 0 : index
      %c0_16 = arith.constant 0 : index
      %29 = vector.load %arg5[%c0_14, %c0_15, %c0_16] : memref<1x8x128xf32, #tpu.memory_space<vmem>>, vector<1x8x128xf32>
      %cst_17 = arith.constant 0.0833333358 : f32
      %30 = vector.broadcast %cst_17 : f32 to vector<1x8x128xf32>
      %31 = arith.mulf %29, %30 : vector<1x8x128xf32>
      %c0_18 = arith.constant 0 : index
      %32 = memref.load %arg4[%c0_18] : memref<1xf32, #tpu.memory_space<smem>>
      %33 = vector.broadcast %32 : f32 to vector<1x8x128xf32>
      %34 = arith.addf %31, %33 : vector<1x8x128xf32>
      %35 = arith.negf %34 : vector<1x8x128xf32>
      %36 = math.exp %35 : vector<1x8x128xf32>
      %cst_19 = arith.constant 1.000000e+00 : f32
      %37 = vector.broadcast %cst_19 : f32 to vector<1x8x128xf32>
      %38 = arith.addf %37, %36 : vector<1x8x128xf32>
      %39 = arith.divf %37, %38 : vector<1x8x128xf32>
      %c0_20 = arith.constant 0 : index
      %c0_21 = arith.constant 0 : index
      %c0_22 = arith.constant 0 : index
      %40 = vector.load %arg5[%c0_20, %c0_21, %c0_22] : memref<1x8x128xf32, #tpu.memory_space<vmem>>, vector<1x8x128xf32>
      tpu.vector_store %arg5[%c0_20, %c0_21, %c0_22], %39 {strides = array<i32>} : memref<1x8x128xf32, #tpu.memory_space<vmem>>, vector<1x8x128xf32>,
    } else {
    }
    return
  }
  func.func @transform_0(%arg0: i32, %arg1: i32) -> (i32, i32, i32) {
    %c0_i32 = arith.constant 0 : i32
    %c0_i32_0 = arith.constant 0 : i32
    return %arg0, %arg1, %c0_i32 : i32, i32, i32
  }
  func.func @transform_1(%arg0: i32, %arg1: i32) -> (i32, i32) {
    %c0_i32 = arith.constant 0 : i32
    %c0_i32_0 = arith.constant 0 : i32
    %c0_i32_1 = arith.constant 0 : i32
    return %c0_i32, %c0_i32_0 : i32, i32
  }
  func.func @transform_2(%arg0: i32, %arg1: i32) -> i32 {
    %c0_i32 = arith.constant 0 : i32
    %c0_i32_0 = arith.constant 0 : i32
    return %c0_i32 : i32
  }
  func.func @transform_3(%arg0: i32, %arg1: i32) -> (i32, i32, i32) {
    %c0_i32 = arith.constant 0 : i32
    %c0_i32_0 = arith.constant 0 : i32
    %c0_i32_1 = arith.constant 0 : i32
    return %arg0, %c0_i32, %c0_i32_0 : i32, i32, i32
  }
}

</mosaic_0001>

<llo_original>
// kernel: tpu_custom_call.1
$region0: #{tpu_custom_call.1}
  #allocation0 [shape = 'u32[]', space=smem, size = 0x4, offset = 0x4, fixed_abs, tag = 'smem constant byte address 0x4 - core index']
  #allocation1 [shape = 'u32[72,128]{1,0:T(1,128)}', space=vmem, size = 0x9000, scoped, tag = 'internal scratch']
  #allocation2 [shape = 'f32[1]{0:T(128)S(6)}', space=smem, size = 0x200, scoped, tag = 'scoped memory for tpu_custom_call.1']
  %s0 = inlined_call_operand.vmem [shape: f32[2,12,768], index: 0, kind: input, shape index: {}]
  %s1 = inlined_call_operand.vmem [shape: f32[1,768], index: 1, kind: input, shape index: {}]
  %s2 = inlined_call_operand.<no memory space> [shape: f32[1], index: 2, kind: input, shape index: {}]
  %s3 = inlined_call_operand.hbm [shape: f32[2,8,128], index: 3, kind: output, shape index: {}]
  %s4 = sld [smem:[#allocation0]]
  $region53: #{tpu_custom_call.1} parent=0
    _
  %s6 = ssub.s32 1, %s4
  %s7 = scalar_select 0, %s6, %s4
  %8 = sst [smem:[#allocation2]] %s2
  $region1: #{tpu_custom_call.1} parent=0
    #allocation3 [shape = 'u8[8192]{0}', space=vmem, size = 0x2000, scoped, tag = 'output window, operand 0']
    #allocation4 [shape = 's32[2]{0}', space=sflag, size = 0x8, scoped, tag = 'scoped memory for tpu_custom_call.1']
    %9 = vsyncpa [#allocation4], 0
    %s10 = scalar_lea.sflag [#allocation4], 1
    %11 = vsyncpa %s10, 0
    loop: start=0, step=1, limit=6
    $region2: #{tpu_custom_call.1} parent=1 // loop_pre_header
      _
    $region3: #{tpu_custom_call.1} parent=1 // loop_header
      %s13 = sphi 0, %s17
      %p14 = scmp.ge.s32.totalorder %s13, 6
      %s20 = sphi 0, %s32
      %s21 = sphi 0, %s28
      %s22 = sphi 0, %s20
      %s23 = sphi 0, %s21
      %s24 = sphi 0, %s22
      %s25 = sphi 0, %s23
      %s37 = sphi 0, %s39
      %s40 = sphi 0, %s37
      %s41 = sphi 0, %s40
      %s57 = sphi 0, %s41
      %s61 = sphi 0, %s61
      %s63 = sphi 0, %s61
      %s64 = sphi 0, %s63
      %s78 = sphi 0, %s64
      %s82 = sphi 0, %s82
      %s84 = sphi 0, %s82
      %s85 = sphi 0, %s84
      %s99 = sphi 0, %s85
      %s105 = sphi 0, %s107
      %s108 = sphi 0, %s105
      %s109 = sphi 0, %s108
      %s125 = sphi 0, %s109
    $region4: #{tpu_custom_call.1} parent=1 // loop_header_branch
      %16 = sbr.rel (%p14) target = $region8
    $region5: #{tpu_custom_call.1} parent=1 // loop_body
      %s18 = ssub.s32 %s13, 1
      %s19 = ssub.s32 %s13, 2
      %s26 = sadd.s32 1, %s21
      %p27 = scmp.ge.s32.totalorder %s26, 2
      %s28 = scalar_select %p27, 0, %s26
      %s29 = sadd.s32 1, %s20
      %s30 = scalar_select %p27, %s29, %s20
      %p31 = scmp.ge.s32.totalorder %s30, 2
      %s32 = scalar_select %p31, 0, %s30
      %s33 = ssub.s32 %s20, %s32
      %s34 = ssub.s32 %s21, %s28
      %s35 = sor.u32 %s33, %s34
      %p36 = scmp.eq.s32.totalorder %s35, 0
      %s38 = sadd.s32 %s37, 1
      %s39 = scalar_select %p36, %s37, %s38
      %p42 = pneg %p36
      %p43 = scmp.eq.s32.totalorder %s13, 3
      %p44 = por %p42, %p43
      %p45 = scmp.ne.s32.totalorder %s37, %s40
      %p46 = scmp.eq.s32.totalorder %s13, 0
      %p47 = por %p45, %p46
      %p48 = scmp.ne.s32.totalorder %s37, %s40
      %p49 = scmp.eq.s32.totalorder %s18, 3
      %p50 = por %p48, %p49
      %p51 = scmp.ne.s32.totalorder %s40, %s41
      %p52 = scmp.eq.s32.totalorder %s18, 0
      %p53 = por %p51, %p52
      %p54 = scmp.ne.s32.totalorder %s40, %s41
      %p55 = scmp.eq.s32.totalorder %s19, 3
      %p56 = por %p54, %p55
      %p58 = scmp.ne.s32.totalorder %s41, %s57
      %p59 = scmp.eq.s32.totalorder %s19, 0
      %p60 = por %p58, %p59
      %s62 = sadd.s32 %s61, 1
      %p65 = scmp.eq.s32.totalorder %s13, 3
      %p66 = scmp.ne.s32.totalorder %s61, %s63
      %p67 = scmp.eq.s32.totalorder %s13, 0
      %p68 = por %p66, %p67
      %p69 = scmp.ne.s32.totalorder %s61, %s63
      %p70 = scmp.eq.s32.totalorder %s18, 3
      %p71 = por %p69, %p70
      %p72 = scmp.ne.s32.totalorder %s63, %s64
      %p73 = scmp.eq.s32.totalorder %s18, 0
      %p74 = por %p72, %p73
      %p75 = scmp.ne.s32.totalorder %s63, %s64
      %p76 = scmp.eq.s32.totalorder %s19, 3
      %p77 = por %p75, %p76
      %p79 = scmp.ne.s32.totalorder %s64, %s78
      %p80 = scmp.eq.s32.totalorder %s19, 0
      %p81 = por %p79, %p80
      %s83 = sadd.s32 %s82, 1
      %p86 = scmp.eq.s32.totalorder %s13, 3
      %p87 = scmp.ne.s32.totalorder %s82, %s84
      %p88 = scmp.eq.s32.totalorder %s13, 0
      %p89 = por %p87, %p88
      %p90 = scmp.ne.s32.totalorder %s82, %s84
      %p91 = scmp.eq.s32.totalorder %s18, 3
      %p92 = por %p90, %p91
      %p93 = scmp.ne.s32.totalorder %s84, %s85
      %p94 = scmp.eq.s32.totalorder %s18, 0
      %p95 = por %p93, %p94
      %p96 = scmp.ne.s32.totalorder %s84, %s85
      %p97 = scmp.eq.s32.totalorder %s19, 3
      %p98 = por %p96, %p97
      %p100 = scmp.ne.s32.totalorder %s85, %s99
      %p101 = scmp.eq.s32.totalorder %s19, 0
      %p102 = por %p100, %p101
      %s103 = ssub.s32 %s20, %s32
      %p104 = scmp.eq.s32.totalorder %s103, 0
      %s106 = sadd.s32 %s105, 1
      %s107 = scalar_select %p104, %s105, %s106
      %p110 = pneg %p104
      %p111 = scmp.eq.s32.totalorder %s13, 3
      %p112 = por %p110, %p111
      %p113 = scmp.ne.s32.totalorder %s105, %s108
      %p114 = scmp.eq.s32.totalorder %s13, 0
      %p115 = por %p113, %p114
      %p116 = scmp.ne.s32.totalorder %s105, %s108
      %p117 = scmp.eq.s32.totalorder %s18, 3
      %p118 = por %p116, %p117
      %p119 = scmp.ne.s32.totalorder %s108, %s109
      %p120 = scmp.eq.s32.totalorder %s18, 0
      %p121 = por %p119, %p120
      %p122 = scmp.ne.s32.totalorder %s108, %s109
      %p123 = scmp.eq.s32.totalorder %s19, 3
      %p124 = por %p122, %p123
      %p126 = scmp.ne.s32.totalorder %s109, %s125
      %p127 = scmp.eq.s32.totalorder %s19, 0
      %p128 = por %p126, %p127
      %p129 = scmp.le.s32.totalorder 1, %s13
      %p130 = scmp.lt.s32.totalorder %s13, 5
      %p131 = pnand %p129, %p130
      %p132 = pneg %p131
      // Predicated region
      $region9: #{tpu_custom_call.1} parent=5 // pred_check
        _
      $region10: #{tpu_custom_call.1} parent=5 // pred_check_branch
        %134 = sbr.rel (%p131) target = $region12
      $region11: #{tpu_custom_call.1} parent=5 // pred_region
        %s135 = ssub.s32 %s13, 1
        // Predicated region
        $region13: #{tpu_custom_call.1} parent=11 // pred_check
          %p136 = pneg %p74
        $region14: #{tpu_custom_call.1} parent=11 // pred_check_branch
          %138 = sbr.rel (%p136) target = $region16
        $region15: #{tpu_custom_call.1} parent=11 // pred_region
          _
        $region16: #{tpu_custom_call.1} parent=11 // pred_fallthru
          _
        // Predicated region
        $region17: #{tpu_custom_call.1} parent=11 // pred_check
          %p139 = pneg %p95
        $region18: #{tpu_custom_call.1} parent=11 // pred_check_branch
          %141 = sbr.rel (%p139) target = $region20
        $region19: #{tpu_custom_call.1} parent=11 // pred_region
          _
        $region20: #{tpu_custom_call.1} parent=11 // pred_fallthru
          _
      $region12: #{tpu_custom_call.1} parent=5 // pred_fallthru
        _
      %p142 = scmp.lt.s32.totalorder %s13, 4
      // Predicated region
      $region21: #{tpu_custom_call.1} parent=5 // pred_check
        %p143 = pneg %p142
      $region22: #{tpu_custom_call.1} parent=5 // pred_check_branch
        %145 = sbr.rel (%p143) target = $region24
      $region23: #{tpu_custom_call.1} parent=5 // pred_region
        // Predicated region
        $region25: #{tpu_custom_call.1} parent=23 // pred_check
          %p146 = pneg %p47
        $region26: #{tpu_custom_call.1} parent=23 // pred_check_branch
          %148 = sbr.rel (%p146) target = $region28
        $region27: #{tpu_custom_call.1} parent=23 // pred_region
          %p149 = scmp.lt.s32.totalorder %s20, 1
          %s150 = scalar_select %p149, %s20, 1
          %p151 = scmp.lt.s32.totalorder %s21, 1
          %s152 = scalar_select %p151, %s21, 1
          %s153 = smul.addr %s152, 6
          %s154 = smul.addr %s150, 12
          %s155 = sadd.s32 %s153, %s154
          %s156 = smul.addr %s155, 8
          %s157 = scalar_lea.vmem %s0, %s156
        $region28: #{tpu_custom_call.1} parent=23 // pred_fallthru
          _
      $region24: #{tpu_custom_call.1} parent=5 // pred_fallthru
        _
      %p158 = scmp.le.s32.totalorder 1, %s13
      %p159 = scmp.lt.s32.totalorder %s13, 5
      %p160 = pnand %p158, %p159
      %p161 = pneg %p160
      // Predicated region
      $region29: #{tpu_custom_call.1} parent=5 // pred_check
        _
      $region30: #{tpu_custom_call.1} parent=5 // pred_check_branch
        %163 = sbr.rel (%p160) target = $region32
      $region31: #{tpu_custom_call.1} parent=5 // pred_region
        %s164 = ssub.s32 %s13, 1
        %p165 = scmp.lt.s32.totalorder %s22, 1
        %s166 = scalar_select %p165, %s22, 1
        %p167 = scmp.lt.s32.totalorder %s23, 1
        %s168 = scalar_select %p167, %s23, 1
        %s169 = smul.addr %s168, 6
        %s170 = smul.addr %s166, 12
        %s171 = sadd.s32 %s169, %s170
        %s172 = smul.addr %s171, 8
        %s173 = scalar_lea.vmem %s0, %s172
        %p174 = pneg %p53
        %p175 = pneg %p50
        %p176 = pneg %p74
        %p177 = pneg %p71
        %p178 = pneg %p95
        %p179 = pneg %p92
        %p180 = pneg %p121
        %p181 = pneg %p118
        %s182 = sand.u32 %s108, 1
        %s183 = scalar_lea.sflag [#allocation4], %s182
        %s184 = sand.u32 %s108, 1
        %s185 = smul.addr %s184, 8
        %s186 = scalar_lea.vmem [#allocation3], %s185
        %p187 = scmp.lt.s32.totalorder %s22, 1
        %s188 = scalar_select %p187, %s22, 1
        %p189 = scmp.lt.s32.totalorder %s23, 1
        %s190 = scalar_select %p189, %s23, 1
        %s191 = smul.addr %s190, 6
        %s192 = smul.addr %s188, 12
        %s193 = sadd.s32 %s191, %s192
        %s194 = smul.addr %s193, 8
        %s195 = scalar_lea.vmem %s0, %s194
        %p196 = scmp.eq.s32.totalorder %s23, 0
        // Predicated region
        $region33: #{tpu_custom_call.1} parent=31 // pred_check
          %p197 = pneg %p196
        $region34: #{tpu_custom_call.1} parent=31 // pred_check_branch
          %199 = sbr.rel (%p197) target = $region36
        $region35: #{tpu_custom_call.1} parent=31 // pred_region
          %200 = vst [vmem:[%s186] sm:$0xff] 0.0
        $region36: #{tpu_custom_call.1} parent=31 // pred_fallthru
          _
        %v201 = vld [vmem:[%s195] sm:$0xff]
        %v202 = vld [vmem:[%s195 + $0x8] sm:$0xff]
        %v203 = vld [vmem:[%s195 + $0x10] sm:$0xff]
        %v204 = vld [vmem:[%s195 + $0x18] sm:$0xff]
        %v205 = vld [vmem:[%s195 + $0x20] sm:$0xff]
        %v206 = vld [vmem:[%s195 + $0x28] sm:$0xff]
        %v207 = vld [vmem:[%s1] sm:$0x3f]
        %v209 = vperm.slane %v207, 0
        %v210 = vperm.slane %v207, 1
        %v211 = vperm.slane %v207, 2
        %v212 = vperm.slane %v207, 3
        %v213 = vperm.slane %v207, 4
        %v214 = vperm.slane %v207, 5
        %v221 = vmul.f32 %v201, %v209
        %v222 = vmul.f32 %v202, %v210
        %v223 = vmul.f32 %v203, %v211
        %v224 = vmul.f32 %v204, %v212
        %v225 = vmul.f32 %v205, %v213
        %v226 = vmul.f32 %v206, %v214
        %v227 = vadd.f32 %v221, %v222
        %v228 = vadd.f32 %v227, %v223
        %v229 = vadd.f32 %v228, %v224
        %v230 = vadd.f32 %v229, %v225
        %v231 = vadd.f32 %v230, %v226
        %232 = vadd.xlane.f32.xlu0 %v231
        %v233 = vpop.xlane.xlu0 %232
        %v234 = vlaneseq
        %v235 = vshrl.u32 %v234, 7
        %s236 = smul.u32 %s23, 8
        %v237 = vstv %s236
        %v238 = vadd.s32 %v235, %v237
        %vm239 = vcmp.lt.s32.totalorder %v238, 12
        %v240 = vsel %vm239, %v233, 0.0
        %v241 = vld [vmem:[%s186] sm:$0xff]
        %vm242 = vcmask 7168
        %v243 = vsel %vm242, %v240, 0.0
        %244 = vadd.xlane.f32.xlu0 %v243
        %v245 = vpop.xlane.xlu0 %244
        %v246 = vrot.slane %v245, 4
        %v247 = vadd.f32 %v245, %v246
        %v248 = vrot.slane %v247, 2
        %v249 = vadd.f32 %v247, %v248
        %v250 = vrot.slane %v249, 1
        %v251 = vadd.f32 %v249, %v250
        %s252 = vtos %v251
        %v253 = vstv %s252
        %v254 = vadd.f32 %v241, %v253
        %255 = vst [vmem:[%s186] sm:$0xff] %v254
        %p256 = scmp.eq.s32.totalorder %s23, 1
        // Predicated region
        $region37: #{tpu_custom_call.1} parent=31 // pred_check
          %p257 = pneg %p256
        $region38: #{tpu_custom_call.1} parent=31 // pred_check_branch
          %259 = sbr.rel (%p257) target = $region40
        $region39: #{tpu_custom_call.1} parent=31 // pred_region
          %v260 = vld [vmem:[%s186] sm:$0xff]
          %v261 = vmul.f32 %v260, 0.083333336
          %s262 = sld [smem:[#allocation2]]
          %v263 = vstv %s262
          %v264 = vadd.f32 %v261, %v263
          %v265 = vxor.u32 %v264, 2147483648
          %v266 = vmul.f32 %v265, 1.442695
          %v267 = vpow.pop %v266
          %v268 = vadd.f32 %v267, 1.0
          %v269 = vrcp.pop %v268
          %v270 = vmul.f32 %v268, %v269
          %v271 = vsub.f32 1.0, %v270
          %v272 = vmul.f32 %v269, %v271
          %v273 = vadd.f32 %v269, %v272
          %vm274 = vweird.f32 %v268
          %vm275 = vweird.f32 %v269
          %vm276 = vmor %vm274, %vm275
          %v277 = vsel %vm276, %v269, %v273
          %v278 = vand.u32 2147483647, %v268
          %vm279 = vcmp.eq.f32.partialorder %v278, 8.507059e+37
          %v280 = vand.u32 %v268, 2147483648
          %v281 = vor.u32 1.1754944e-38, %v280
          %v282 = vsel %vm279, %v281, %v277
          %v283 = vmul.f32 1.0, %v282
          %284 = vst [vmem:[%s186] sm:$0xff] %v283
        $region40: #{tpu_custom_call.1} parent=31 // pred_fallthru
          _
        %s285 = sand.u32 %s108, 1
        %s286 = scalar_lea.sflag [#allocation4], %s285
        %s287 = sand.u32 %s108, 1
        %s288 = smul.addr %s287, 8
        %s289 = scalar_lea.vmem [#allocation3], %s288
        // Predicated region
        $region41: #{tpu_custom_call.1} parent=31 // pred_check
          %p290 = pneg %p118
        $region42: #{tpu_custom_call.1} parent=31 // pred_check_branch
          %292 = sbr.rel (%p290) target = $region44
        $region43: #{tpu_custom_call.1} parent=31 // pred_region
          %294 = vsyncadd %s286, 0
          %s295 = smul.addr %s22, 8
          %s296 = scalar_lea.hbm %s3, %s295
          %s298 = sshll.u32 %s289, 4
          %s299 = int_to_ptr.vmem [resolvable:$true] %s298
          %s300 = sshll.u32 %s296, 4
          %s301 = int_to_ptr.hbm [resolvable:$true] %s300
          %303 = dma.vmem_to_hbm [thread:$0]  %s299, 128, %s301, %s286
        $region44: #{tpu_custom_call.1} parent=31 // pred_fallthru
          _
      $region32: #{tpu_custom_call.1} parent=5 // pred_fallthru
        _
      %p304 = scmp.le.s32.totalorder 2, %s13
      // Predicated region
      $region45: #{tpu_custom_call.1} parent=5 // pred_check
        %p305 = pneg %p304
      $region46: #{tpu_custom_call.1} parent=5 // pred_check_branch
        %307 = sbr.rel (%p305) target = $region48
      $region47: #{tpu_custom_call.1} parent=5 // pred_region
        %s308 = ssub.s32 %s13, 2
        // Predicated region
        $region49: #{tpu_custom_call.1} parent=47 // pred_check
          %p309 = pneg %p124
        $region50: #{tpu_custom_call.1} parent=47 // pred_check_branch
          %311 = sbr.rel (%p309) target = $region52
        $region51: #{tpu_custom_call.1} parent=47 // pred_region
          %s312 = sand.u32 %s109, 1
          %s313 = scalar_lea.sflag [#allocation4], %s312
          %s314 = sand.u32 %s109, 1
          %s315 = smul.addr %s314, 8
          %s316 = scalar_lea.vmem [#allocation3], %s315
          %318 = dma.done %s313, 128
        $region52: #{tpu_custom_call.1} parent=47 // pred_fallthru
          _
      $region48: #{tpu_custom_call.1} parent=5 // pred_fallthru
        _
    $region6: #{tpu_custom_call.1} parent=1 // loop_footer
      %s17 = sadd.s32 1, %s13
    $region7: #{tpu_custom_call.1} parent=1 // loop_footer_branch
      %12 = sbr.rel target = $region3
    $region8: #{tpu_custom_call.1} parent=1 // loop_exit
      _
    %319 = vsyncpa [#allocation4], 1
    %s320 = scalar_lea.sflag [#allocation4], 1
    %321 = vsyncpa %s320, 1

</llo_original>
